<compile_context>
chip_gen: v5e
topology: v5e:2x2
jax: 0.10.0
libtpu: 0.0.40
codegen_flags: <defaults>
</compile_context>

<pallas_src>
import jax
import jax.numpy as jnp
from jax import lax
from jax.experimental import pallas as pl
from jax.experimental.pallas import tpu as pltpu

LANES = 128
SUBLANES = 8
NUM_CORES = 2                    # leading grid axis; sharded across TCs where possible
MAX_BLOCK_BYTES = 2 * 1024 * 1024   # per-input, per-pipeline-buffer block size
VMEM_LIMIT_BYTES = 32 * 1024 * 1024  # safe on v5e/v6e (128 MiB) and v7x (64 MiB)


def _round_up(x, m):
    return ((x + m - 1) // m) * m


def _make_l1_kernel(valid_rows, block_rows, needs_mask):
    """Build the kernel closure (valid_rows / block_rows are compile-time ints)."""
    groups = block_rows // SUBLANES

    def kernel(xh_ref, x_ref, out_ref):
        i = pl.program_id(1)

        @pl.when(i == 0)
        def _init():
            out_ref[...] = jnp.zeros_like(out_ref)

        diff = jnp.abs(xh_ref[...].astype(jnp.float32)
                       - x_ref[...].astype(jnp.float32))

        if needs_mask:
            # Mask rows past the end of the array (partial last block and any
            # phantom block introduced by the rectangular core split).
            c = pl.program_id(0)
            bpc = pl.num_programs(1)
            start_row = (c * bpc + i) * block_rows
            row_ids = start_row + lax.broadcasted_iota(
                jnp.int32, (block_rows, 1), 0)
            diff = jnp.where(row_ids < valid_rows, diff, 0.0)

        # Fold (block_rows, 128) -> (groups, 8, 128) and reduce the leading
        # (untiled) axis: vreg-wise VPU adds into a single (8, 128) vreg tile.
        out_ref[...] += jnp.sum(diff.reshape(groups, SUBLANES, LANES), axis=0)

    return kernel


def l1_loss(x_hat, x):
    """Mean absolute error over all elements — matches F.l1_loss(x_hat, x)."""
    assert x_hat.shape == x.shape
    n_elem = x_hat.size
    if n_elem == 0:
        return jnp.full((), jnp.nan, x_hat.dtype)

    itemsize = jnp.dtype(x_hat.dtype).itemsize
    packing = max(1, 4 // itemsize)
    gran = SUBLANES * packing            # row granularity: 8 f32 / 16 bf16 / 32 int8

    flat_xh = x_hat.reshape(-1)
    flat_x = x.reshape(-1)

    rem = n_elem % LANES
    if rem:
        # TODO(synk): this pad costs one extra HBM pass per operand; a fully
        # zero-copy path for lane-unaligned N needs a 1-D / manual-DMA variant.
        pad = LANES - rem
        flat_xh = jnp.pad(flat_xh, (0, pad))
        flat_x = jnp.pad(flat_x, (0, pad))
    rows = flat_xh.size // LANES         # padded zeros contribute |0-0| = 0

    xh2 = flat_xh.reshape(rows, LANES)   # free reshape (no copy)
    x2 = flat_x.reshape(rows, LANES)

    max_rows = max(gran, (MAX_BLOCK_BYTES // (LANES * itemsize)) // gran * gran)
    block_rows = min(max_rows, _round_up(pl.cdiv(rows, NUM_CORES), gran))
    block_rows = max(block_rows, gran)

    total_blocks = pl.cdiv(rows, block_rows)
    ncores = min(NUM_CORES, total_blocks)
    bpc = pl.cdiv(total_blocks, ncores)
    phantom = ncores * bpc != total_blocks
    needs_mask = (rows % block_rows != 0) or phantom

    if phantom:
        # Phantom blocks re-read the last real block; their rows are masked off.
        def in_map(c, i):
            return (jnp.minimum(c * bpc + i, total_blocks - 1), 0)
    else:
        def in_map(c, i):
            return (c * bpc + i, 0)

    kernel = _make_l1_kernel(rows, block_rows, needs_mask)

    partials = pl.pallas_call(
        kernel,
        out_shape=jax.ShapeDtypeStruct((ncores * SUBLANES, LANES), jnp.float32),
        grid_spec=pltpu.PrefetchScalarGridSpec(
            num_scalar_prefetch=0,
            grid=(ncores, bpc),
            in_specs=[
                pl.BlockSpec((block_rows, LANES), in_map),
                pl.BlockSpec((block_rows, LANES), in_map),
            ],
            out_specs=pl.BlockSpec((SUBLANES, LANES), lambda c, i: (c, 0)),
        ),
        compiler_params=pltpu.CompilerParams(
            dimension_semantics=("parallel", "arbitrary"),
            vmem_limit_bytes=VMEM_LIMIT_BYTES,
        ),
        cost_estimate=pl.CostEstimate(
            flops=3 * rows * LANES,
            bytes_accessed=2 * rows * LANES * itemsize
            + ncores * SUBLANES * LANES * 4,
            transcendentals=0,
        ),
    )(xh2, x2)

    total = jnp.sum(partials)
    # Match torch: the returned loss carries the input dtype.
    return (total / jnp.float32(n_elem)).astype(x_hat.dtype)


if __name__ == "__main__":
    key = jax.random.PRNGKey(0)
    k1, k2, k3, k4 = jax.random.split(key, 4)

    loss_fn = jax.jit(l1_loss)

    # small audio-like batch: (batch=2, channels=4, 16x16 "frames") -> N % 128 == 0
    shape = (2, 4, 16, 16)
    x_hat = jax.random.normal(k1, shape, dtype=jnp.float32)
    x = jax.random.normal(k2, shape, dtype=jnp.float32)
    loss = loss_fn(x_hat, x)
    jax.block_until_ready(loss)
    ref = jnp.mean(jnp.abs(x_hat - x))
    assert jnp.allclose(loss, ref, rtol=1e-5, atol=1e-6), (loss, ref)

    # unaligned size: exercises the lane pad + in-kernel partial-block masking
    shape2 = (2, 3, 5000)
    y_hat = jax.random.normal(k3, shape2, dtype=jnp.float32)
    y = jax.random.normal(k4, shape2, dtype=jnp.float32)
    loss2 = loss_fn(y_hat, y)
    jax.block_until_ready(loss2)
    ref2 = jnp.mean(jnp.abs(y_hat - y))
    assert jnp.allclose(loss2, ref2, rtol=1e-5, atol=1e-6), (loss2, ref2)

    print("KERNEL_OK")
</pallas_src>

<mosaic_0001>
module attributes {stable_mosaic.version = 11 : i64} {
  func.func @kernel(%arg0: i32, %arg1: i32, %arg2: memref<8x128xf32, #tpu.memory_space<vmem>>, %arg3: memref<8x128xf32, #tpu.memory_space<vmem>>, %arg4: memref<8x128xf32, #tpu.memory_space<vmem>>) attributes {dimension_semantics = [#tpu.dimension_semantics<parallel>, #tpu.dimension_semantics<arbitrary>], iteration_bounds = array<i64: 2, 1>, scalar_prefetch = 0 : i64, scratch_operands = 0 : i64, tpu.core_type = #tpu.core_type<tc>, window_params = [{transform_indices = @transform_0, window_bounds = array<i64: 8, 128>}, {transform_indices = @transform_1, window_bounds = array<i64: 8, 128>}, {transform_indices = @transform_2, window_bounds = array<i64: 8, 128>}]} {
    %c0_i32 = arith.constant 0 : i32
    %0 = arith.cmpi eq, %arg1, %c0_i32 : i32
    %1 = arith.extui %0 : i1 to i32
    %c0_i32_0 = arith.constant 0 : i32
    %2 = arith.cmpi ne, %1, %c0_i32_0 : i32
    scf.if %2 {
      %cst_8 = arith.constant 0.000000e+00 : f32
      %12 = vector.broadcast %cst_8 : f32 to vector<8x128xf32>
      %c0_9 = arith.constant 0 : index
      %c0_10 = arith.constant 0 : index
      %13 = vector.load %arg4[%c0_9, %c0_10] : memref<8x128xf32, #tpu.memory_space<vmem>>, vector<8x128xf32>
      tpu.vector_store %arg4[%c0_9, %c0_10], %12 {strides = array<i32>} : memref<8x128xf32, #tpu.memory_space<vmem>>, vector<8x128xf32>,
    } else {
    }
    %c0 = arith.constant 0 : index
    %c0_1 = arith.constant 0 : index
    %3 = vector.load %arg2[%c0, %c0_1] : memref<8x128xf32, #tpu.memory_space<vmem>>, vector<8x128xf32>
    %c0_2 = arith.constant 0 : index
    %c0_3 = arith.constant 0 : index
    %4 = vector.load %arg3[%c0_2, %c0_3] : memref<8x128xf32, #tpu.memory_space<vmem>>, vector<8x128xf32>
    %5 = arith.subf %3, %4 : vector<8x128xf32>
    %6 = math.absf %5 : vector<8x128xf32>
    %c0_4 = arith.constant 0 : index
    %c0_5 = arith.constant 0 : index
    %7 = vector.load %arg4[%c0_4, %c0_5] : memref<8x128xf32, #tpu.memory_space<vmem>>, vector<8x128xf32>
    %8 = vector.shape_cast %6 : vector<8x128xf32> to vector<1x8x128xf32>
    %cst = arith.constant dense<0.000000e+00> : vector<8x128xf32>
    %9 = vector.multi_reduction <add>, %8, %cst [0] : vector<1x8x128xf32> to vector<8x128xf32>
    %10 = arith.addf %7, %9 : vector<8x128xf32>
    %c0_6 = arith.constant 0 : index
    %c0_7 = arith.constant 0 : index
    %11 = vector.load %arg4[%c0_6, %c0_7] : memref<8x128xf32, #tpu.memory_space<vmem>>, vector<8x128xf32>
    tpu.vector_store %arg4[%c0_6, %c0_7], %10 {strides = array<i32>} : memref<8x128xf32, #tpu.memory_space<vmem>>, vector<8x128xf32>,
    return
  }
  func.func @transform_0(%arg0: i32, %arg1: i32) -> (i32, i32) {
    %c1_i32 = arith.constant 1 : i32
    %0 = arith.muli %arg0, %c1_i32 : i32
    %1 = arith.addi %0, %arg1 : i32
    %c0_i32 = arith.constant 0 : i32
    %c0_i32_0 = arith.constant 0 : i32
    return %1, %c0_i32 : i32, i32
  }
  func.func @transform_1(%arg0: i32, %arg1: i32) -> (i32, i32) {
    %c1_i32 = arith.constant 1 : i32
    %0 = arith.muli %arg0, %c1_i32 : i32
    %1 = arith.addi %0, %arg1 : i32
    %c0_i32 = arith.constant 0 : i32
    %c0_i32_0 = arith.constant 0 : i32
    return %1, %c0_i32 : i32, i32
  }
  func.func @transform_2(%arg0: i32, %arg1: i32) -> (i32, i32) {
    %c0_i32 = arith.constant 0 : i32
    %c0_i32_0 = arith.constant 0 : i32
    return %arg0, %c0_i32 : i32, i32
  }
}

</mosaic_0001>

<llo_original>
// kernel: l1_loss.1
$region0: #{l1_loss.1}
  #allocation0 [shape = 'u32[]', space=smem, size = 0x4, offset = 0x4, fixed_abs, tag = 'smem constant byte address 0x4 - core index']
  #allocation1 [shape = 'u32[72,128]{1,0:T(1,128)}', space=vmem, size = 0x9000, scoped, tag = 'internal scratch']
  %s0 = inlined_call_operand.vmem [shape: f32[16,128], index: 0, kind: input, shape index: {}]
  %s1 = inlined_call_operand.vmem [shape: f32[16,128], index: 1, kind: input, shape index: {}]
  %s2 = inlined_call_operand.vmem [shape: f32[16,128], index: 2, kind: output, shape index: {}]
  %s3 = sld [smem:[#allocation0]]
  $region45: #{l1_loss.1} parent=0
    _
  %s5 = ssub.s32 1, %s3
  %s6 = scalar_select 0, %s5, %s3
  loop: start=0, step=1, limit=4
  $region2: #{l1_loss.1} parent=0 // loop_pre_header
    _
  $region3: #{l1_loss.1} parent=0 // loop_header
    %s8 = sphi 0, %s12
    %p9 = scmp.ge.s32.totalorder %s8, 4
    %s15 = sphi 0, %s27
    %s16 = sphi 0, %s23
    %s17 = sphi 0, %s15
    %s18 = sphi 0, %s16
    %s19 = sphi 0, %s17
    %s20 = sphi 0, %s18
    %s32 = sphi 0, %s34
    %s35 = sphi 0, %s32
    %s36 = sphi 0, %s35
    %s52 = sphi 0, %s36
    %s60 = sphi 0, %s62
    %s63 = sphi 0, %s60
    %s64 = sphi 0, %s63
    %s80 = sphi 0, %s64
    %s86 = sphi 0, %s88
    %s89 = sphi 0, %s86
    %s90 = sphi 0, %s89
    %s106 = sphi 0, %s90
  $region4: #{l1_loss.1} parent=0 // loop_header_branch
    %11 = sbr.rel (%p9) target = $region8
  $region5: #{l1_loss.1} parent=0 // loop_body
    %s13 = ssub.s32 %s8, 1
    %s14 = ssub.s32 %s8, 2
    %s21 = sadd.s32 1, %s16
    %p22 = scmp.ge.s32.totalorder %s21, 1
    %s23 = scalar_select %p22, 0, %s21
    %s24 = sadd.s32 1, %s15
    %s25 = scalar_select %p22, %s24, %s15
    %p26 = scmp.ge.s32.totalorder %s25, 2
    %s27 = scalar_select %p26, 0, %s25
    %s28 = sadd.s32 %s15, %s16
    %s29 = sadd.s32 %s27, %s23
    %s30 = ssub.s32 %s28, %s29
    %p31 = scmp.eq.s32.totalorder %s30, 0
    %s33 = sadd.s32 %s32, 1
    %s34 = scalar_select %p31, %s32, %s33
    %p37 = pneg %p31
    %p38 = scmp.eq.s32.totalorder %s8, 1
    %p39 = por %p37, %p38
    %p40 = scmp.ne.s32.totalorder %s32, %s35
    %p41 = scmp.eq.s32.totalorder %s8, 0
    %p42 = por %p40, %p41
    %p43 = scmp.ne.s32.totalorder %s32, %s35
    %p44 = scmp.eq.s32.totalorder %s13, 1
    %p45 = por %p43, %p44
    %p46 = scmp.ne.s32.totalorder %s35, %s36
    %p47 = scmp.eq.s32.totalorder %s13, 0
    %p48 = por %p46, %p47
    %p49 = scmp.ne.s32.totalorder %s35, %s36
    %p50 = scmp.eq.s32.totalorder %s14, 1
    %p51 = por %p49, %p50
    %p53 = scmp.ne.s32.totalorder %s36, %s52
    %p54 = scmp.eq.s32.totalorder %s14, 0
    %p55 = por %p53, %p54
    %s56 = sadd.s32 %s15, %s16
    %s57 = sadd.s32 %s27, %s23
    %s58 = ssub.s32 %s56, %s57
    %p59 = scmp.eq.s32.totalorder %s58, 0
    %s61 = sadd.s32 %s60, 1
    %s62 = scalar_select %p59, %s60, %s61
    %p65 = pneg %p59
    %p66 = scmp.eq.s32.totalorder %s8, 1
    %p67 = por %p65, %p66
    %p68 = scmp.ne.s32.totalorder %s60, %s63
    %p69 = scmp.eq.s32.totalorder %s8, 0
    %p70 = por %p68, %p69
    %p71 = scmp.ne.s32.totalorder %s60, %s63
    %p72 = scmp.eq.s32.totalorder %s13, 1
    %p73 = por %p71, %p72
    %p74 = scmp.ne.s32.totalorder %s63, %s64
    %p75 = scmp.eq.s32.totalorder %s13, 0
    %p76 = por %p74, %p75
    %p77 = scmp.ne.s32.totalorder %s63, %s64
    %p78 = scmp.eq.s32.totalorder %s14, 1
    %p79 = por %p77, %p78
    %p81 = scmp.ne.s32.totalorder %s64, %s80
    %p82 = scmp.eq.s32.totalorder %s14, 0
    %p83 = por %p81, %p82
    %s84 = ssub.s32 %s15, %s27
    %p85 = scmp.eq.s32.totalorder %s84, 0
    %s87 = sadd.s32 %s86, 1
    %s88 = scalar_select %p85, %s86, %s87
    %p91 = pneg %p85
    %p92 = scmp.eq.s32.totalorder %s8, 1
    %p93 = por %p91, %p92
    %p94 = scmp.ne.s32.totalorder %s86, %s89
    %p95 = scmp.eq.s32.totalorder %s8, 0
    %p96 = por %p94, %p95
    %p97 = scmp.ne.s32.totalorder %s86, %s89
    %p98 = scmp.eq.s32.totalorder %s13, 1
    %p99 = por %p97, %p98
    %p100 = scmp.ne.s32.totalorder %s89, %s90
    %p101 = scmp.eq.s32.totalorder %s13, 0
    %p102 = por %p100, %p101
    %p103 = scmp.ne.s32.totalorder %s89, %s90
    %p104 = scmp.eq.s32.totalorder %s14, 1
    %p105 = por %p103, %p104
    %p107 = scmp.ne.s32.totalorder %s90, %s106
    %p108 = scmp.eq.s32.totalorder %s14, 0
    %p109 = por %p107, %p108
    %p110 = scmp.le.s32.totalorder 1, %s8
    %p111 = scmp.lt.s32.totalorder %s8, 3
    %p112 = pnand %p110, %p111
    %p113 = pneg %p112
    // Predicated region
    $region9: #{l1_loss.1} parent=5 // pred_check
      _
    $region10: #{l1_loss.1} parent=5 // pred_check_branch
      %115 = sbr.rel (%p112) target = $region12
    $region11: #{l1_loss.1} parent=5 // pred_region
      %s116 = ssub.s32 %s8, 1
    $region12: #{l1_loss.1} parent=5 // pred_fallthru
      _
    %p117 = scmp.lt.s32.totalorder %s8, 2
    // Predicated region
    $region13: #{l1_loss.1} parent=5 // pred_check
      %p118 = pneg %p117
    $region14: #{l1_loss.1} parent=5 // pred_check_branch
      %120 = sbr.rel (%p118) target = $region16
    $region15: #{l1_loss.1} parent=5 // pred_region
      // Predicated region
      $region17: #{l1_loss.1} parent=15 // pred_check
        %p121 = pneg %p42
      $region18: #{l1_loss.1} parent=15 // pred_check_branch
        %123 = sbr.rel (%p121) target = $region20
      $region19: #{l1_loss.1} parent=15 // pred_region
        %s124 = sadd.s32 %s15, %s16
        %p125 = scmp.lt.s32.totalorder %s124, 1
        %s126 = scalar_select %p125, %s124, 1
        %s127 = smul.addr %s126, 8
        %s128 = scalar_lea.vmem %s0, %s127
        %s129 = sadd.s32 %s15, %s16
      $region20: #{l1_loss.1} parent=15 // pred_fallthru
        _
      // Predicated region
      $region21: #{l1_loss.1} parent=15 // pred_check
        %p130 = pneg %p70
      $region22: #{l1_loss.1} parent=15 // pred_check_branch
        %132 = sbr.rel (%p130) target = $region24
      $region23: #{l1_loss.1} parent=15 // pred_region
        %s133 = sadd.s32 %s15, %s16
        %p134 = scmp.lt.s32.totalorder %s133, 1
        %s135 = scalar_select %p134, %s133, 1
        %s136 = smul.addr %s135, 8
        %s137 = scalar_lea.vmem %s1, %s136
        %s138 = sadd.s32 %s15, %s16
      $region24: #{l1_loss.1} parent=15 // pred_fallthru
        _
    $region16: #{l1_loss.1} parent=5 // pred_fallthru
      _
    %p139 = scmp.le.s32.totalorder 1, %s8
    %p140 = scmp.lt.s32.totalorder %s8, 3
    %p141 = pnand %p139, %p140
    %p142 = pneg %p141
    // Predicated region
    $region25: #{l1_loss.1} parent=5 // pred_check
      _
    $region26: #{l1_loss.1} parent=5 // pred_check_branch
      %144 = sbr.rel (%p141) target = $region28
    $region27: #{l1_loss.1} parent=5 // pred_region
      %s145 = ssub.s32 %s8, 1
      %s146 = sadd.s32 %s17, %s18
      %p147 = scmp.lt.s32.totalorder %s146, 1
      %s148 = scalar_select %p147, %s146, 1
      %s149 = smul.addr %s148, 8
      %s150 = scalar_lea.vmem %s0, %s149
      %p151 = pneg %p48
      %p152 = pneg %p45
      %s153 = sadd.s32 %s17, %s18
      %p154 = scmp.lt.s32.totalorder %s153, 1
      %s155 = scalar_select %p154, %s153, 1
      %s156 = smul.addr %s155, 8
      %s157 = scalar_lea.vmem %s1, %s156
      %p158 = pneg %p76
      %p159 = pneg %p73
      %p160 = pneg %p102
      %p161 = pneg %p99
      %p162 = scmp.lt.s32.totalorder %s17, 1
      %s163 = scalar_select %p162, %s17, 1
      %s164 = smul.addr %s163, 8
      %s165 = scalar_lea.vmem %s2, %s164
      %s166 = sadd.s32 %s17, %s18
      %p167 = scmp.lt.s32.totalorder %s166, 1
      %s168 = scalar_select %p167, %s166, 1
      %s169 = smul.addr %s168, 8
      %s170 = scalar_lea.vmem %s0, %s169
      %s171 = sadd.s32 %s17, %s18
      %s172 = sadd.s32 %s17, %s18
      %p173 = scmp.lt.s32.totalorder %s172, 1
      %s174 = scalar_select %p173, %s172, 1
      %s175 = smul.addr %s174, 8
      %s176 = scalar_lea.vmem %s1, %s175
      %s177 = sadd.s32 %s17, %s18
      %p178 = scmp.lt.s32.totalorder %s17, 1
      %s179 = scalar_select %p178, %s17, 1
      %s180 = smul.addr %s179, 8
      %s181 = scalar_lea.vmem %s2, %s180
      %p182 = scmp.eq.s32.totalorder %s18, 0
      // Predicated region
      $region29: #{l1_loss.1} parent=27 // pred_check
        %p183 = pneg %p182
      $region30: #{l1_loss.1} parent=27 // pred_check_branch
        %185 = sbr.rel (%p183) target = $region32
      $region31: #{l1_loss.1} parent=27 // pred_region
        %186 = vst [vmem:[%s181] sm:$0xff] 0.0
      $region32: #{l1_loss.1} parent=27 // pred_fallthru
        _
      %v187 = vld [vmem:[%s170] sm:$0xff]
      %v188 = vld [vmem:[%s176] sm:$0xff]
      %v189 = vsub.f32 %v187, %v188
      %v190 = vand.u32 2147483647, %v189
      %v191 = vld [vmem:[%s181] sm:$0xff]
      %v192 = vadd.f32 %v190, 0.0
      %v193 = vadd.f32 %v191, %v192
      %194 = vst [vmem:[%s181] sm:$0xff] %v193
      %p195 = scmp.lt.s32.totalorder %s17, 1
      %s196 = scalar_select %p195, %s17, 1
      %s197 = smul.addr %s196, 8
      %s198 = scalar_lea.vmem %s2, %s197
      // Predicated region
      $region33: #{l1_loss.1} parent=27 // pred_check
        %p199 = pneg %p99
      $region34: #{l1_loss.1} parent=27 // pred_check_branch
        %201 = sbr.rel (%p199) target = $region36
      $region35: #{l1_loss.1} parent=27 // pred_region
        _
      $region36: #{l1_loss.1} parent=27 // pred_fallthru
        _
    $region28: #{l1_loss.1} parent=5 // pred_fallthru
      _
    %p202 = scmp.le.s32.totalorder 2, %s8
    // Predicated region
    $region37: #{l1_loss.1} parent=5 // pred_check
      %p203 = pneg %p202
    $region38: #{l1_loss.1} parent=5 // pred_check_branch
      %205 = sbr.rel (%p203) target = $region40
    $region39: #{l1_loss.1} parent=5 // pred_region
      %s206 = ssub.s32 %s8, 2
      // Predicated region
      $region41: #{l1_loss.1} parent=39 // pred_check
        %p207 = pneg %p105
      $region42: #{l1_loss.1} parent=39 // pred_check_branch
        %209 = sbr.rel (%p207) target = $region44
      $region43: #{l1_loss.1} parent=39 // pred_region
        %p210 = scmp.lt.s32.totalorder %s19, 1
        %s211 = scalar_select %p210, %s19, 1
        %s212 = smul.addr %s211, 8
        %s213 = scalar_lea.vmem %s2, %s212
      $region44: #{l1_loss.1} parent=39 // pred_fallthru
        _
    $region40: #{l1_loss.1} parent=5 // pred_fallthru
      _
  $region6: #{l1_loss.1} parent=0 // loop_footer
    %s12 = sadd.s32 1, %s8
  $region7: #{l1_loss.1} parent=0 // loop_footer_branch
    %7 = sbr.rel target = $region3
  $region8: #{l1_loss.1} parent=0 // loop_exit
    _

</llo_original>
